<compile_context>
chip_gen: v6e
topology: v6e:2x2x1
jax: 0.10.0
libtpu: 0.0.40
codegen_flags: <defaults>
</compile_context>

<pallas_src>
import numpy as np
import jax
import jax.numpy as jnp
from jax.experimental import pallas as pl
from jax.experimental.pallas import tpu as pltpu

H = W = 28                # spatial size implied by Linear(25088, 10) = 32*28*28
HW = H * W                # 784
HROWS = H + 2             # 30 rows after zero-padding top/bottom
HWP = 896                 # 7*128 lane-dense padded spatial axis (>= 30*28 = 840)
CIN = 1
COUT = 32
KS = 3
NTAP = KS * KS            # 9
FEAT = COUT * HW          # 25088
NCLASS = 10
BATCH_BLOCK = 128         # images per grid step (review: 8 was far too small)

SELU_ALPHA = 1.6732632423543772848170429916717
SELU_SCALE = 1.0507009873554804934193349852946


def fused_kernel(x_ref, cm_ref, w_ref, lw_ref, lb_ref, o_ref):
    # x_ref : (bb, 896)      f32  row-padded flat image: pixel (r,c) at 28*(r+1)+c
    # cm_ref: (2, 896)       f32  column masks (row0 zeroes col-27 sources, row1 col-0)
    # w_ref : (32, 10)       f32  SMEM: 9 tap weights + conv bias per channel
    # lw_ref: (32, 10, 896)  f32  linear weight, channel-major, spatial shifted by +28
    # lb_ref: (1, 10)        f32  linear bias
    # o_ref : (bb, 10)       f32  softmax probabilities
    x = x_ref[...]
    cm = cm_ref[...]
    x_l = x * cm[0:1, :]          # source slab for dj == 0 taps
    x_r = x * cm[1:2, :]          # source slab for dj == 2 taps

    # 9 shifted taps built on the XLU (no HBM im2col): tap[p] = src[p + off].
    taps = []
    for di in range(KS):
        for dj in range(KS):
            off = W * (di - 1) + (dj - 1)
            src = (x_l, x, x_r)[dj]
            taps.append(src if off == 0
                        else pltpu.roll(src, shift=(-off) % HWP, axis=1))

    def channel_body(c, logits_acc):
        # Conv for channel c: 9-tap scalar MAC on the shared (bb, 896) slabs.
        a = taps[0] * w_ref[c, 0]
        for k in range(1, NTAP):
            a = a + taps[k] * w_ref[c, k]
        a = a + w_ref[c, NTAP]                        # conv bias
        # SELU (exp(x)-1 form; identical formula in the reference below).
        h = SELU_SCALE * jnp.where(a > 0, a, SELU_ALPHA * (jnp.exp(a) - 1.0))
        # Partial Linear on the MXU: (bb, 896) . (10, 896)^T -> (bb, 10).
        part = jax.lax.dot_general(
            h, lw_ref[c],
            dimension_numbers=(((1,), (1,)), ((), ())),
            preferred_element_type=jnp.float32)
        return logits_acc + part

    logits = jax.lax.fori_loop(
        0, COUT, channel_body,
        jnp.zeros((x.shape[0], NCLASS), jnp.float32))
    logits = logits + lb_ref[...]

    # Softmax over the 10 classes (torch.nn.Softmax() on 2-D resolves to dim=1).
    m = jnp.max(logits, axis=-1, keepdims=True)
    e = jnp.exp(logits - m)
    o_ref[...] = (e / jnp.sum(e, axis=-1, keepdims=True)).astype(o_ref.dtype)


def prepare_params(conv_w, conv_b, lin_w, lin_b):
    """One-time parameter repack (done OUTSIDE the jitted forward)."""
    # Conv weight (32,1,3,3) + bias (32,) -> SMEM table (32, 10): cols 0..8 = taps
    # (k = 3*di + dj), col 9 = bias.
    w_smem = jnp.concatenate(
        [conv_w.reshape(COUT, NTAP), conv_b.reshape(COUT, 1)], axis=1)
    # Linear weight: PyTorch NCHW flatten index is c*784 + (28*r + col); the kernel
    # activation lives at p' = 28*(r+1) + col, so shift by +28 and pad to 896.
    lwr = jnp.transpose(lin_w.reshape(NCLASS, COUT, HW), (1, 0, 2))   # (32,10,784)
    lwr = jnp.pad(lwr, ((0, 0), (0, 0), (W, HWP - HW - W)))           # (32,10,896)
    lb2 = lin_b.reshape(1, NCLASS)
    # Constant column masks (kill left/right wrap of the +-1 column taps).
    col = np.arange(HWP) % W
    cmask = jnp.asarray(np.stack([(col != W - 1), (col != 0)]).astype(np.float32))
    return cmask, w_smem, lwr, lb2


def _round_up(a, b):
    return (a + b - 1) // b * b


@jax.jit
def model_forward(x, cmask, w_smem, lwr, lb2):
    """x: (N, 1, 28, 28) float32 NCHW -> (N, 10) softmax probabilities."""
    n = x.shape[0]
    bb = min(BATCH_BLOCK, _round_up(n, 8))
    n_pad = _round_up(n, bb)

    # Zero row above/below, flatten, lane-pad 840 -> 896 (~3.5 KB/image of HBM
    # input, no 9x im2col copy).
    x2 = x.reshape(n, H, W)
    xr = jnp.pad(x2, ((0, n_pad - n), (1, 1), (0, 0)))               # (n_pad,30,28)
    xf = jnp.pad(xr.reshape(n_pad, HROWS * W), ((0, 0), (0, HWP - HROWS * W)))

    probs = pl.pallas_call(
        fused_kernel,
        out_shape=jax.ShapeDtypeStruct((n_pad, NCLASS), jnp.float32),
        grid=(n_pad // bb,),
        in_specs=[
            pl.BlockSpec((bb, HWP), lambda i: (i, 0)),
            pl.BlockSpec((2, HWP), lambda i: (0, 0)),
            pl.BlockSpec(memory_space=pltpu.MemorySpace.SMEM),
            pl.BlockSpec((COUT, NCLASS, HWP), lambda i: (0, 0, 0)),
            pl.BlockSpec((1, NCLASS), lambda i: (0, 0)),
        ],
        out_specs=pl.BlockSpec((bb, NCLASS), lambda i: (i, 0)),
        compiler_params=pltpu.CompilerParams(
            dimension_semantics=("parallel",),
            vmem_limit_bytes=48 * 1024 * 1024),
    )(xf, cmask, w_smem, lwr, lb2)
    return probs[:n]


def reference_forward(x, conv_w, conv_b, lin_w, lin_b):
    y = jax.lax.conv_general_dilated(
        x, conv_w, window_strides=(1, 1), padding=((1, 1), (1, 1)),
        dimension_numbers=("NCHW", "OIHW", "NCHW"),
        precision=jax.lax.Precision.HIGHEST)
    y = y + conv_b[None, :, None, None]
    y = SELU_SCALE * jnp.where(y > 0, y, SELU_ALPHA * (jnp.exp(y) - 1.0))
    h = y.reshape(y.shape[0], -1)
    logits = jnp.dot(h, lin_w.T, precision=jax.lax.Precision.HIGHEST) + lin_b
    return jax.nn.softmax(logits, axis=1)


if __name__ == "__main__":
    key = jax.random.PRNGKey(0)
    kx, kw1, kb1, kw2, kb2 = jax.random.split(key, 5)

    N = 2
    x = jax.random.normal(kx, (N, CIN, H, W), dtype=jnp.float32)

    # Deterministic parameter init (PyTorch-default uniform ranges), no file I/O.
    fan_conv = CIN * KS * KS
    cbound = 1.0 / np.sqrt(fan_conv)
    lbound = 1.0 / np.sqrt(FEAT)
    conv_w = jax.random.uniform(kw1, (COUT, CIN, KS, KS), jnp.float32, -cbound, cbound)
    conv_b = jax.random.uniform(kb1, (COUT,), jnp.float32, -cbound, cbound)
    lin_w = jax.random.uniform(kw2, (NCLASS, FEAT), jnp.float32, -lbound, lbound)
    lin_b = jax.random.uniform(kb2, (NCLASS,), jnp.float32, -lbound, lbound)

    params = prepare_params(conv_w, conv_b, lin_w, lin_b)
    params = jax.block_until_ready(params)

    out = model_forward(x, *params)
    out = jax.block_until_ready(out)

    ref = reference_forward(x, conv_w, conv_b, lin_w, lin_b)
    np.testing.assert_allclose(np.asarray(out), np.asarray(ref), rtol=1e-4, atol=1e-5)
    print("KERNEL_OK")
</pallas_src>

<mosaic_0001>
module attributes {stable_mosaic.version = 11 : i64} {
  func.func @fused_kernel(%arg0: i32, %arg1: memref<8x896xf32, #tpu.memory_space<vmem>>, %arg2: memref<2x896xf32, #tpu.memory_space<vmem>>, %arg3: memref<32x10xf32, #tpu.memory_space<smem>>, %arg4: memref<32x10x896xf32, #tpu.memory_space<vmem>>, %arg5: memref<1x10xf32, #tpu.memory_space<vmem>>, %arg6: memref<8x10xf32, #tpu.memory_space<vmem>>) attributes {dimension_semantics = [#tpu.dimension_semantics<parallel>], iteration_bounds = array<i64: 1>, scalar_prefetch = 0 : i64, scratch_operands = 0 : i64, tpu.core_type = #tpu.core_type<tc>, window_params = [{transform_indices = @transform_0, window_bounds = array<i64: 8, 896>}, {pipeline_mode = #tpu.pipeline_mode<synchronous>, transform_indices = @transform_1, window_bounds = array<i64: 2, 896>}, {transform_indices = @transform_2, window_bounds = array<i64: 32, 10>}, {pipeline_mode = #tpu.pipeline_mode<synchronous>, transform_indices = @transform_3, window_bounds = array<i64: 32, 10, 896>}, {pipeline_mode = #tpu.pipeline_mode<synchronous>, transform_indices = @transform_4, window_bounds = array<i64: 1, 10>}, {transform_indices = @transform_5, window_bounds = array<i64: 8, 10>}]} {
    %c0 = arith.constant 0 : index
    %c0_0 = arith.constant 0 : index
    %0 = vector.load %arg1[%c0, %c0_0] : memref<8x896xf32, #tpu.memory_space<vmem>>, vector<8x896xf32>
    %c0_1 = arith.constant 0 : index
    %c0_2 = arith.constant 0 : index
    %1 = vector.load %arg2[%c0_1, %c0_2] : memref<2x896xf32, #tpu.memory_space<vmem>>, vector<2x896xf32>
    %2 = vector.extract_strided_slice %1 {offsets = [0, 0], sizes = [1, 896], strides = [1, 1]} : vector<2x896xf32> to vector<1x896xf32>
    %3 = vector.broadcast %2 : vector<1x896xf32> to vector<8x896xf32>
    %4 = arith.mulf %0, %3 : vector<8x896xf32>
    %5 = vector.extract_strided_slice %1 {offsets = [1, 0], sizes = [1, 896], strides = [1, 1]} : vector<2x896xf32> to vector<1x896xf32>
    %6 = vector.broadcast %5 : vector<1x896xf32> to vector<8x896xf32>
    %7 = arith.mulf %0, %6 : vector<8x896xf32>
    %c29_i32 = arith.constant 29 : i32
    %8 = tpu.dynamic_rotate %4 by %c29_i32 dim 1 : vector<8x896xf32>, i32 -> vector<8x896xf32>
    %c28_i32 = arith.constant 28 : i32
    %9 = tpu.dynamic_rotate %0 by %c28_i32 dim 1 : vector<8x896xf32>, i32 -> vector<8x896xf32>
    %c27_i32 = arith.constant 27 : i32
    %10 = tpu.dynamic_rotate %7 by %c27_i32 dim 1 : vector<8x896xf32>, i32 -> vector<8x896xf32>
    %c1_i32 = arith.constant 1 : i32
    %11 = tpu.dynamic_rotate %4 by %c1_i32 dim 1 : vector<8x896xf32>, i32 -> vector<8x896xf32>
    %c895_i32 = arith.constant 895 : i32
    %12 = tpu.dynamic_rotate %7 by %c895_i32 dim 1 : vector<8x896xf32>, i32 -> vector<8x896xf32>
    %c869_i32 = arith.constant 869 : i32
    %13 = tpu.dynamic_rotate %4 by %c869_i32 dim 1 : vector<8x896xf32>, i32 -> vector<8x896xf32>
    %c868_i32 = arith.constant 868 : i32
    %14 = tpu.dynamic_rotate %0 by %c868_i32 dim 1 : vector<8x896xf32>, i32 -> vector<8x896xf32>
    %c867_i32 = arith.constant 867 : i32
    %15 = tpu.dynamic_rotate %7 by %c867_i32 dim 1 : vector<8x896xf32>, i32 -> vector<8x896xf32>
    %cst = arith.constant 0.000000e+00 : f32
    %16 = vector.broadcast %cst : f32 to vector<8x10xf32>
    %c0_i32 = arith.constant 0 : i32
    %c32_i32 = arith.constant 32 : i32
    %17 = arith.addi %c0_i32, %c32_i32 : i32
    %c1_i32_3 = arith.constant 1 : i32
    %18 = scf.for %arg7 = %c0_i32 to %17 step %c1_i32_3 iter_args(%arg8 = %16) -> (vector<8x10xf32>)  : i32 {
      %32 = arith.index_cast %arg7 : i32 to index
      %c0_11 = arith.constant 0 : index
      %33 = memref.load %arg3[%32, %c0_11] : memref<32x10xf32, #tpu.memory_space<smem>>
      %34 = vector.broadcast %33 : f32 to vector<8x896xf32>
      %35 = arith.mulf %8, %34 : vector<8x896xf32>
      %36 = arith.index_cast %arg7 : i32 to index
      %c1 = arith.constant 1 : index
      %37 = memref.load %arg3[%36, %c1] : memref<32x10xf32, #tpu.memory_space<smem>>
      %38 = vector.broadcast %37 : f32 to vector<8x896xf32>
      %39 = arith.mulf %9, %38 : vector<8x896xf32>
      %40 = arith.addf %35, %39 : vector<8x896xf32>
      %41 = arith.index_cast %arg7 : i32 to index
      %c2 = arith.constant 2 : index
      %42 = memref.load %arg3[%41, %c2] : memref<32x10xf32, #tpu.memory_space<smem>>
      %43 = vector.broadcast %42 : f32 to vector<8x896xf32>
      %44 = arith.mulf %10, %43 : vector<8x896xf32>
      %45 = arith.addf %40, %44 : vector<8x896xf32>
      %46 = arith.index_cast %arg7 : i32 to index
      %c3 = arith.constant 3 : index
      %47 = memref.load %arg3[%46, %c3] : memref<32x10xf32, #tpu.memory_space<smem>>
      %48 = vector.broadcast %47 : f32 to vector<8x896xf32>
      %49 = arith.mulf %11, %48 : vector<8x896xf32>
      %50 = arith.addf %45, %49 : vector<8x896xf32>
      %51 = arith.index_cast %arg7 : i32 to index
      %c4 = arith.constant 4 : index
      %52 = memref.load %arg3[%51, %c4] : memref<32x10xf32, #tpu.memory_space<smem>>
      %53 = vector.broadcast %52 : f32 to vector<8x896xf32>
      %54 = arith.mulf %0, %53 : vector<8x896xf32>
      %55 = arith.addf %50, %54 : vector<8x896xf32>
      %56 = arith.index_cast %arg7 : i32 to index
      %c5 = arith.constant 5 : index
      %57 = memref.load %arg3[%56, %c5] : memref<32x10xf32, #tpu.memory_space<smem>>
      %58 = vector.broadcast %57 : f32 to vector<8x896xf32>
      %59 = arith.mulf %12, %58 : vector<8x896xf32>
      %60 = arith.addf %55, %59 : vector<8x896xf32>
      %61 = arith.index_cast %arg7 : i32 to index
      %c6 = arith.constant 6 : index
      %62 = memref.load %arg3[%61, %c6] : memref<32x10xf32, #tpu.memory_space<smem>>
      %63 = vector.broadcast %62 : f32 to vector<8x896xf32>
      %64 = arith.mulf %13, %63 : vector<8x896xf32>
      %65 = arith.addf %60, %64 : vector<8x896xf32>
      %66 = arith.index_cast %arg7 : i32 to index
      %c7 = arith.constant 7 : index
      %67 = memref.load %arg3[%66, %c7] : memref<32x10xf32, #tpu.memory_space<smem>>
      %68 = vector.broadcast %67 : f32 to vector<8x896xf32>
      %69 = arith.mulf %14, %68 : vector<8x896xf32>
      %70 = arith.addf %65, %69 : vector<8x896xf32>
      %71 = arith.index_cast %arg7 : i32 to index
      %c8 = arith.constant 8 : index
      %72 = memref.load %arg3[%71, %c8] : memref<32x10xf32, #tpu.memory_space<smem>>
      %73 = vector.broadcast %72 : f32 to vector<8x896xf32>
      %74 = arith.mulf %15, %73 : vector<8x896xf32>
      %75 = arith.addf %70, %74 : vector<8x896xf32>
      %76 = arith.index_cast %arg7 : i32 to index
      %c9 = arith.constant 9 : index
      %77 = memref.load %arg3[%76, %c9] : memref<32x10xf32, #tpu.memory_space<smem>>
      %78 = vector.broadcast %77 : f32 to vector<8x896xf32>
      %79 = arith.addf %75, %78 : vector<8x896xf32>
      %cst_12 = arith.constant 0.000000e+00 : f32
      %80 = vector.broadcast %cst_12 : f32 to vector<8x896xf32>
      %81 = arith.cmpf ogt, %79, %80 : vector<8x896xf32>
      %82 = math.exp %79 : vector<8x896xf32>
      %cst_13 = arith.constant 1.000000e+00 : f32
      %83 = vector.broadcast %cst_13 : f32 to vector<8x896xf32>
      %84 = arith.subf %82, %83 : vector<8x896xf32>
      %cst_14 = arith.constant 1.67326319 : f32
      %85 = vector.broadcast %cst_14 : f32 to vector<8x896xf32>
      %86 = arith.mulf %85, %84 : vector<8x896xf32>
      %87 = arith.select %81, %79, %86 : vector<8x896xi1>, vector<8x896xf32>
      %cst_15 = arith.constant 1.05070102 : f32
      %88 = vector.broadcast %cst_15 : f32 to vector<8x896xf32>
      %89 = arith.mulf %88, %87 : vector<8x896xf32>
      %90 = arith.index_cast %arg7 : i32 to index
      %c0_16 = arith.constant 0 : index
      %c0_17 = arith.constant 0 : index
      %91 = vector.load %arg4[%90, %c0_16, %c0_17] : memref<32x10x896xf32, #tpu.memory_space<vmem>>, vector<1x10x896xf32>
      %92 = vector.shape_cast %91 : vector<1x10x896xf32> to vector<10x896xf32>
      %cst_18 = arith.constant dense<0.000000e+00> : vector<8x10xf32>
      %93 = tpu.matmul %89, %92, %cst_18 {dimension_numbers = #tpu.dot_dimension_numbers<[1], [1], [0], [0], [0, 0, 1, 0], [], []>} : vector<8x896xf32>, vector<10x896xf32>, vector<8x10xf32> -> vector<8x10xf32>
      %94 = arith.addf %arg8, %93 : vector<8x10xf32>
      scf.yield %94 : vector<8x10xf32>
    }
    %c32_i32_4 = arith.constant 32 : i32
    %c0_5 = arith.constant 0 : index
    %c0_6 = arith.constant 0 : index
    %19 = vector.load %arg5[%c0_5, %c0_6] : memref<1x10xf32, #tpu.memory_space<vmem>>, vector<1x10xf32>
    %20 = vector.broadcast %19 : vector<1x10xf32> to vector<8x10xf32>
    %21 = arith.addf %18, %20 : vector<8x10xf32>
    %cst_7 = arith.constant dense<0xFF800000> : vector<8xf32>
    %22 = vector.multi_reduction <maximumf>, %21, %cst_7 [1] : vector<8x10xf32> to vector<8xf32>
    %23 = vector.shape_cast %22 : vector<8xf32> to vector<8x1xf32>
    %24 = vector.broadcast %23 : vector<8x1xf32> to vector<8x10xf32>
    %25 = arith.subf %21, %24 : vector<8x10xf32>
    %26 = math.exp %25 : vector<8x10xf32>
    %cst_8 = arith.constant dense<0.000000e+00> : vector<8xf32>
    %27 = vector.multi_reduction <add>, %26, %cst_8 [1] : vector<8x10xf32> to vector<8xf32>
    %28 = vector.shape_cast %27 : vector<8xf32> to vector<8x1xf32>
    %29 = vector.broadcast %28 : vector<8x1xf32> to vector<8x10xf32>
    %30 = arith.divf %26, %29 : vector<8x10xf32>
    %c0_9 = arith.constant 0 : index
    %c0_10 = arith.constant 0 : index
    %31 = vector.load %arg6[%c0_9, %c0_10] : memref<8x10xf32, #tpu.memory_space<vmem>>, vector<8x10xf32>
    tpu.vector_store %arg6[%c0_9, %c0_10], %30 {strides = array<i32>} : memref<8x10xf32, #tpu.memory_space<vmem>>, vector<8x10xf32>,
    return
  }
  func.func @transform_0(%arg0: i32) -> (i32, i32) {
    %c0_i32 = arith.constant 0 : i32
    %c0_i32_0 = arith.constant 0 : i32
    return %arg0, %c0_i32 : i32, i32
  }
  func.func @transform_1(%arg0: i32) -> (i32, i32) {
    %c0_i32 = arith.constant 0 : i32
    %c0_i32_0 = arith.constant 0 : i32
    %c0_i32_1 = arith.constant 0 : i32
    return %c0_i32, %c0_i32_0 : i32, i32
  }
  func.func @transform_2(%arg0: i32) -> (i32, i32) {
    %c0_i32 = arith.constant 0 : i32
    %c0_i32_0 = arith.constant 0 : i32
    %c0_i32_1 = arith.constant 0 : i32
    return %c0_i32, %c0_i32_0 : i32, i32
  }
  func.func @transform_3(%arg0: i32) -> (i32, i32, i32) {
    %c0_i32 = arith.constant 0 : i32
    %c0_i32_0 = arith.constant 0 : i32
    %c0_i32_1 = arith.constant 0 : i32
    %c0_i32_2 = arith.constant 0 : i32
    return %c0_i32, %c0_i32_0, %c0_i32_1 : i32, i32, i32
  }
  func.func @transform_4(%arg0: i32) -> (i32, i32) {
    %c0_i32 = arith.constant 0 : i32
    %c0_i32_0 = arith.constant 0 : i32
    %c0_i32_1 = arith.constant 0 : i32
    return %c0_i32, %c0_i32_0 : i32, i32
  }
  func.func @transform_5(%arg0: i32) -> (i32, i32) {
    %c0_i32 = arith.constant 0 : i32
    %c0_i32_0 = arith.constant 0 : i32
    return %arg0, %c0_i32 : i32, i32
  }
}

</mosaic_0001>

<llo_original>
// kernel: model_forward.1
$region0: #{model_forward.1}
  #allocation0 [shape = 'u32[]', space=smem, size = 0x4, offset = 0x4, fixed_abs, tag = 'smem constant byte address 0x4 - core index']
  #allocation1 [shape = 'u32[144,128]{1,0:T(1,128)}', space=vmem, size = 0x12000, scoped, tag = 'internal scratch']
  %s0 = inlined_call_operand.vmem [shape: f32[8,896], index: 0, kind: input, shape index: {}]
  %s1 = inlined_call_operand.vmem [shape: f32[2,896], index: 1, kind: input, shape index: {}]
  %s2 = inlined_call_operand.vmem [shape: f32[32,10], index: 2, kind: input, shape index: {}]
  %s3 = inlined_call_operand.vmem [shape: f32[32,10,896], index: 3, kind: input, shape index: {}]
  %s4 = inlined_call_operand.vmem [shape: f32[1,10], index: 4, kind: input, shape index: {}]
  %s5 = inlined_call_operand.vmem [shape: f32[8,10], index: 5, kind: output, shape index: {}]
  %s6 = sld [smem:[#allocation0]]
  $region41: #{model_forward.1} parent=0
    _
  %s8 = ssub.s32 1, %s6
  %s9 = scalar_select 0, %s8, %s6
  $region1: #{model_forward.1} parent=0
    #allocation2 [shape = 'u8[16384]{0}', space=smem, size = 0x4000, scoped, tag = 'input window, operand 2, single buffered']
    #allocation3 [shape = 's32[1]{0}', space=sflag, size = 0x4, scoped, tag = 'scoped memory for model_forward.1']
    %10 = vsyncpa [#allocation3], 0
    // Predicated region
    $region2: #{model_forward.1} parent=1 // pred_check
      _
    $region3: #{model_forward.1} parent=1 // pred_check_branch
      %12 = sbr.rel (0) target = $region5
    $region4: #{model_forward.1} parent=1 // pred_region
      _
    $region5: #{model_forward.1} parent=1 // pred_fallthru
      _
    // Predicated region
    $region6: #{model_forward.1} parent=1 // pred_check
      _
    $region7: #{model_forward.1} parent=1 // pred_check_branch
      %14 = sbr.rel (0) target = $region9
    $region8: #{model_forward.1} parent=1 // pred_region
      _
    $region9: #{model_forward.1} parent=1 // pred_fallthru
      _
    // Predicated region
    $region10: #{model_forward.1} parent=1 // pred_check
      _
    $region11: #{model_forward.1} parent=1 // pred_check_branch
      %16 = sbr.rel (0) target = $region13
    $region12: #{model_forward.1} parent=1 // pred_region
      %s18 = ssub.s32 512, 512
      %19 = vsyncadd [#allocation3], %s18
      %s20 = sshll.u32 %s2, 4
      %s21 = int_to_ptr.vmem [resolvable:$true] %s20
      %26 = dma.vmem_to_smem %s21, 512, [#allocation2], [#allocation3], 128, 128, 8
    $region13: #{model_forward.1} parent=1 // pred_fallthru
      _
    // Predicated region
    $region14: #{model_forward.1} parent=1 // pred_check
      _
    $region15: #{model_forward.1} parent=1 // pred_check_branch
      %28 = sbr.rel (0) target = $region17
    $region16: #{model_forward.1} parent=1 // pred_region
      _
    $region17: #{model_forward.1} parent=1 // pred_fallthru
      _
    // Predicated region
    $region18: #{model_forward.1} parent=1 // pred_check
      _
    $region19: #{model_forward.1} parent=1 // pred_check_branch
      %30 = sbr.rel (0) target = $region21
    $region20: #{model_forward.1} parent=1 // pred_region
      _
    $region21: #{model_forward.1} parent=1 // pred_fallthru
      _
    // Predicated region
    $region22: #{model_forward.1} parent=1 // pred_check
      _
    $region23: #{model_forward.1} parent=1 // pred_check_branch
      %32 = sbr.rel (0) target = $region25
    $region24: #{model_forward.1} parent=1 // pred_region
      %33 = dma.done [#allocation3], 512
    $region25: #{model_forward.1} parent=1 // pred_fallthru
      _
    %34 = sfence
    %v35 = vld [vmem:[%s0] sm:$0xff]
    %v36 = vld [vmem:[%s0 + $0x8] sm:$0xff]
    %v37 = vld [vmem:[%s0 + $0x10] sm:$0xff]
    %v38 = vld [vmem:[%s0 + $0x18] sm:$0xff]
    %v39 = vld [vmem:[%s0 + $0x20] sm:$0xff]
    %v40 = vld [vmem:[%s0 + $0x28] sm:$0xff]
    %v41 = vld [vmem:[%s0 + $0x30] sm:$0xff]
    %v42 = vld [vmem:[%s1] sm:$0xff]
    %v43 = vld [vmem:[%s1 + $0x8] sm:$0x3f]
    %v46 = vlaneseq
    %v47 = vshrl.u32 %v46, 7
    %v48 = vsub.s32 0, %v47
    %v49 = vrot.slane %v42, %v48
    %v50 = vlaneseq
    %v51 = vshrl.u32 %v50, 7
    %v52 = vsub.s32 2, %v51
    %v53 = vrot.slane %v42, %v52
    %v54 = vlaneseq
    %v55 = vshrl.u32 %v54, 7
    %v56 = vsub.s32 4, %v55
    %v57 = vrot.slane %v42, %v56
    %v58 = vlaneseq
    %v59 = vshrl.u32 %v58, 7
    %v60 = vsub.s32 6, %v59
    %v61 = vrot.slane %v42, %v60
    %v62 = vlaneseq
    %v63 = vshrl.u32 %v62, 7
    %v64 = vsub.s32 0, %v63
    %v65 = vrot.slane %v43, %v64
    %v66 = vlaneseq
    %v67 = vshrl.u32 %v66, 7
    %v68 = vsub.s32 2, %v67
    %v69 = vrot.slane %v43, %v68
    %v70 = vlaneseq
    %v71 = vshrl.u32 %v70, 7
    %v72 = vsub.s32 4, %v71
    %v73 = vrot.slane %v43, %v72
    %v81 = vlaneseq
    %v82 = vshrl.u32 %v81, 7
    %v83 = vsub.s32 0, %v82
    %v84 = vrot.slane %v49, %v83
    %v85 = vlaneseq
    %v86 = vshrl.u32 %v85, 7
    %v87 = vsub.s32 0, %v86
    %v88 = vrot.slane %v53, %v87
    %v89 = vlaneseq
    %v90 = vshrl.u32 %v89, 7
    %v91 = vsub.s32 0, %v90
    %v92 = vrot.slane %v57, %v91
    %v93 = vlaneseq
    %v94 = vshrl.u32 %v93, 7
    %v95 = vsub.s32 0, %v94
    %v96 = vrot.slane %v61, %v95
    %v97 = vlaneseq
    %v98 = vshrl.u32 %v97, 7
    %v99 = vsub.s32 0, %v98
    %v100 = vrot.slane %v65, %v99
    %v101 = vlaneseq
    %v102 = vshrl.u32 %v101, 7
    %v103 = vsub.s32 0, %v102
    %v104 = vrot.slane %v69, %v103
    %v105 = vlaneseq
    %v106 = vshrl.u32 %v105, 7
    %v107 = vsub.s32 0, %v106
    %v108 = vrot.slane %v73, %v107
    %v109 = vmul.f32 %v35, %v84
    %v110 = vmul.f32 %v36, %v88
    %v111 = vmul.f32 %v37, %v92
    %v112 = vmul.f32 %v38, %v96
    %v113 = vmul.f32 %v39, %v100
    %v114 = vmul.f32 %v40, %v104
    %v115 = vmul.f32 %v41, %v108
    %v116 = vlaneseq
    %v117 = vshrl.u32 %v116, 7
    %v118 = vsub.s32 1, %v117
    %v119 = vrot.slane %v42, %v118
    %v120 = vlaneseq
    %v121 = vshrl.u32 %v120, 7
    %v122 = vsub.s32 3, %v121
    %v123 = vrot.slane %v42, %v122
    %v124 = vlaneseq
    %v125 = vshrl.u32 %v124, 7
    %v126 = vsub.s32 5, %v125
    %v127 = vrot.slane %v42, %v126
    %v128 = vlaneseq
    %v129 = vshrl.u32 %v128, 7
    %v130 = vsub.s32 7, %v129
    %v131 = vrot.slane %v42, %v130
    %v132 = vlaneseq
    %v133 = vshrl.u32 %v132, 7
    %v134 = vsub.s32 1, %v133
    %v135 = vrot.slane %v43, %v134
    %v136 = vlaneseq
    %v137 = vshrl.u32 %v136, 7
    %v138 = vsub.s32 3, %v137
    %v139 = vrot.slane %v43, %v138
    %v140 = vlaneseq
    %v141 = vshrl.u32 %v140, 7
    %v142 = vsub.s32 5, %v141
    %v143 = vrot.slane %v43, %v142
    %v151 = vlaneseq
    %v152 = vshrl.u32 %v151, 7
    %v153 = vsub.s32 1, %v152
    %v154 = vrot.slane %v119, %v153
    %v155 = vlaneseq
    %v156 = vshrl.u32 %v155, 7
    %v157 = vsub.s32 1, %v156
    %v158 = vrot.slane %v123, %v157
    %v159 = vlaneseq
    %v160 = vshrl.u32 %v159, 7
    %v161 = vsub.s32 1, %v160
    %v162 = vrot.slane %v127, %v161
    %v163 = vlaneseq
    %v164 = vshrl.u32 %v163, 7
    %v165 = vsub.s32 1, %v164
    %v166 = vrot.slane %v131, %v165
    %v167 = vlaneseq
    %v168 = vshrl.u32 %v167, 7
    %v169 = vsub.s32 1, %v168
    %v170 = vrot.slane %v135, %v169
    %v171 = vlaneseq
    %v172 = vshrl.u32 %v171, 7
    %v173 = vsub.s32 1, %v172
    %v174 = vrot.slane %v139, %v173
    %v175 = vlaneseq
    %v176 = vshrl.u32 %v175, 7
    %v177 = vsub.s32 1, %v176
    %v178 = vrot.slane %v143, %v177
    %v179 = vmul.f32 %v35, %v154
    %v180 = vmul.f32 %v36, %v158
    %v181 = vmul.f32 %v37, %v162
    %v182 = vmul.f32 %v38, %v166
    %v183 = vmul.f32 %v39, %v170
    %v184 = vmul.f32 %v40, %v174
    %v185 = vmul.f32 %v41, %v178
    %186 = vrot.lane.b32.xlu0 %v109, 29
    %v187 = vpop.permute.xlu0 %186
    %188 = vrot.lane.b32.xlu0 %v110, 29
    %v189 = vpop.permute.xlu0 %188
    %190 = vrot.lane.b32.xlu0 %v111, 29
    %v191 = vpop.permute.xlu0 %190
    %192 = vrot.lane.b32.xlu0 %v112, 29
    %v193 = vpop.permute.xlu0 %192
    %194 = vrot.lane.b32.xlu0 %v113, 29
    %v195 = vpop.permute.xlu0 %194
    %196 = vrot.lane.b32.xlu0 %v114, 29
    %v197 = vpop.permute.xlu0 %196
    %198 = vrot.lane.b32.xlu0 %v115, 29
    %v199 = vpop.permute.xlu0 %198
    %v200 = vlaneseq
    %v201 = vand.u32 %v200, 127
    %vm202 = vcmp.lt.s32.totalorder %v201, 29
    %v203 = vsel %vm202, %v197, %v199
    %v204 = vsel %vm202, %v195, %v197
    %v205 = vsel %vm202, %v193, %v195
    %v206 = vsel %vm202, %v191, %v193
    %v207 = vsel %vm202, %v189, %v191
    %v208 = vsel %vm202, %v187, %v189
    %v209 = vsel %vm202, %v199, %v187
    %210 = vrot.lane.b32.xlu0 %v35, 28
    %v211 = vpop.permute.xlu0 %210
    %212 = vrot.lane.b32.xlu0 %v36, 28
    %v213 = vpop.permute.xlu0 %212
    %214 = vrot.lane.b32.xlu0 %v37, 28
    %v215 = vpop.permute.xlu0 %214
    %216 = vrot.lane.b32.xlu0 %v38, 28
    %v217 = vpop.permute.xlu0 %216
    %218 = vrot.lane.b32.xlu0 %v39, 28
    %v219 = vpop.permute.xlu0 %218
    %220 = vrot.lane.b32.xlu0 %v40, 28
    %v221 = vpop.permute.xlu0 %220
    %222 = vrot.lane.b32.xlu0 %v41, 28
    %v223 = vpop.permute.xlu0 %222
    %vm224 = vcmp.lt.s32.totalorder %v201, 28
    %v225 = vsel %vm224, %v221, %v223
    %v226 = vsel %vm224, %v219, %v221
    %v227 = vsel %vm224, %v217, %v219
    %v228 = vsel %vm224, %v215, %v217
    %v229 = vsel %vm224, %v213, %v215
    %v230 = vsel %vm224, %v211, %v213
    %v231 = vsel %vm224, %v223, %v211
    %232 = vrot.lane.b32.xlu0 %v179, 27
    %v233 = vpop.permute.xlu0 %232
    %234 = vrot.lane.b32.xlu0 %v180, 27
    %v235 = vpop.permute.xlu0 %234
    %236 = vrot.lane.b32.xlu0 %v181, 27
    %v237 = vpop.permute.xlu0 %236
    %238 = vrot.lane.b32.xlu0 %v182, 27
    %v239 = vpop.permute.xlu0 %238
    %240 = vrot.lane.b32.xlu0 %v183, 27
    %v241 = vpop.permute.xlu0 %240
    %242 = vrot.lane.b32.xlu0 %v184, 27
    %v243 = vpop.permute.xlu0 %242
    %244 = vrot.lane.b32.xlu0 %v185, 27
    %v245 = vpop.permute.xlu0 %244
    %vm246 = vcmp.lt.s32.totalorder %v201, 27
    %v247 = vsel %vm246, %v243, %v245
    %v248 = vsel %vm246, %v241, %v243
    %v249 = vsel %vm246, %v239, %v241
    %v250 = vsel %vm246, %v237, %v239
    %v251 = vsel %vm246, %v235, %v237
    %v252 = vsel %vm246, %v233, %v235
    %v253 = vsel %vm246, %v245, %v233
    %254 = vrot.lane.b32.xlu0 %v109, 1
    %v255 = vpop.permute.xlu0 %254
    %256 = vrot.lane.b32.xlu0 %v110, 1
    %v257 = vpop.permute.xlu0 %256
    %258 = vrot.lane.b32.xlu0 %v111, 1
    %v259 = vpop.permute.xlu0 %258
    %260 = vrot.lane.b32.xlu0 %v112, 1
    %v261 = vpop.permute.xlu0 %260
    %262 = vrot.lane.b32.xlu0 %v113, 1
    %v263 = vpop.permute.xlu0 %262
    %264 = vrot.lane.b32.xlu0 %v114, 1
    %v265 = vpop.permute.xlu0 %264
    %266 = vrot.lane.b32.xlu0 %v115, 1
    %v267 = vpop.permute.xlu0 %266
    %vm268 = vcmp.lt.s32.totalorder %v201, 1
    %v269 = vsel %vm268, %v265, %v267
    %v270 = vsel %vm268, %v263, %v265
    %v271 = vsel %vm268, %v261, %v263
    %v272 = vsel %vm268, %v259, %v261
    %v273 = vsel %vm268, %v257, %v259
    %v274 = vsel %vm268, %v255, %v257
    %v275 = vsel %vm268, %v267, %v255
    %276 = vrot.lane.b32.xlu0 %v179, 127
    %v277 = vpop.permute.xlu0 %276
    %278 = vrot.lane.b32.xlu0 %v180, 127
    %v279 = vpop.permute.xlu0 %278
    %280 = vrot.lane.b32.xlu0 %v181, 127
    %v281 = vpop.permute.xlu0 %280
    %282 = vrot.lane.b32.xlu0 %v182, 127
    %v283 = vpop.permute.xlu0 %282
    %284 = vrot.lane.b32.xlu0 %v183, 127
    %v285 = vpop.permute.xlu0 %284
    %286 = vrot.lane.b32.xlu0 %v184, 127
    %v287 = vpop.permute.xlu0 %286
    %288 = vrot.lane.b32.xlu0 %v185, 127
    %v289 = vpop.permute.xlu0 %288
    %vm290 = vcmp.lt.s32.totalorder %v201, 127
    %v291 = vsel %vm290, %v287, %v289
    %v292 = vsel %vm290, %v285, %v287
    %v293 = vsel %vm290, %v283, %v285
    %v294 = vsel %vm290, %v281, %v283
    %v295 = vsel %vm290, %v279, %v281
    %v296 = vsel %vm290, %v277, %v279
    %v297 = vsel %vm290, %v289, %v277
    %298 = vrot.lane.b32.xlu0 %v109, 101
    %v299 = vpop.permute.xlu0 %298
    %300 = vrot.lane.b32.xlu0 %v110, 101
    %v301 = vpop.permute.xlu0 %300
    %302 = vrot.lane.b32.xlu0 %v111, 101
    %v303 = vpop.permute.xlu0 %302
    %304 = vrot.lane.b32.xlu0 %v112, 101
    %v305 = vpop.permute.xlu0 %304
    %306 = vrot.lane.b32.xlu0 %v113, 101
    %v307 = vpop.permute.xlu0 %306
    %308 = vrot.lane.b32.xlu0 %v114, 101
    %v309 = vpop.permute.xlu0 %308
    %310 = vrot.lane.b32.xlu0 %v115, 101
    %v311 = vpop.permute.xlu0 %310
    %vm312 = vcmp.lt.s32.totalorder %v201, 101
    %v313 = vsel %vm312, %v309, %v311
    %v314 = vsel %vm312, %v307, %v309
    %v315 = vsel %vm312, %v305, %v307
    %v316 = vsel %vm312, %v303, %v305
    %v317 = vsel %vm312, %v301, %v303
    %v318 = vsel %vm312, %v299, %v301
    %v319 = vsel %vm312, %v311, %v299
    %320 = vrot.lane.b32.xlu0 %v35, 100
    %v321 = vpop.permute.xlu0 %320
    %322 = vrot.lane.b32.xlu0 %v36, 100
    %v323 = vpop.permute.xlu0 %322
    %324 = vrot.lane.b32.xlu0 %v37, 100
    %v325 = vpop.permute.xlu0 %324
    %326 = vrot.lane.b32.xlu0 %v38, 100
    %v327 = vpop.permute.xlu0 %326
    %328 = vrot.lane.b32.xlu0 %v39, 100
    %v329 = vpop.permute.xlu0 %328
    %330 = vrot.lane.b32.xlu0 %v40, 100
    %v331 = vpop.permute.xlu0 %330
    %332 = vrot.lane.b32.xlu0 %v41, 100
    %v333 = vpop.permute.xlu0 %332
    %vm334 = vcmp.lt.s32.totalorder %v201, 100
    %v335 = vsel %vm334, %v331, %v333
    %v336 = vsel %vm334, %v329, %v331
    %v337 = vsel %vm334, %v327, %v329
    %v338 = vsel %vm334, %v325, %v327
    %v339 = vsel %vm334, %v323, %v325
    %v340 = vsel %vm334, %v321, %v323
    %v341 = vsel %vm334, %v333, %v321
    %342 = vrot.lane.b32.xlu0 %v179, 99
    %v343 = vpop.permute.xlu0 %342
    %344 = vrot.lane.b32.xlu0 %v180, 99
    %v345 = vpop.permute.xlu0 %344
    %346 = vrot.lane.b32.xlu0 %v181, 99
    %v347 = vpop.permute.xlu0 %346
    %348 = vrot.lane.b32.xlu0 %v182, 99
    %v349 = vpop.permute.xlu0 %348
    %350 = vrot.lane.b32.xlu0 %v183, 99
    %v351 = vpop.permute.xlu0 %350
    %352 = vrot.lane.b32.xlu0 %v184, 99
    %v353 = vpop.permute.xlu0 %352
    %354 = vrot.lane.b32.xlu0 %v185, 99
    %v355 = vpop.permute.xlu0 %354
    %vm356 = vcmp.lt.s32.totalorder %v201, 99
    %v357 = vsel %vm356, %v353, %v355
    %v358 = vsel %vm356, %v351, %v353
    %v359 = vsel %vm356, %v349, %v351
    %v360 = vsel %vm356, %v347, %v349
    %v361 = vsel %vm356, %v345, %v347
    %v362 = vsel %vm356, %v343, %v345
    %v363 = vsel %vm356, %v355, %v343
    loop: start=0, step=1, limit=32
    $region26: #{model_forward.1} parent=1 // loop_pre_header
      _
    $region27: #{model_forward.1} parent=1 // loop_header
      %s365 = sphi 0, %s369
      %p366 = scmp.ge.s32.totalorder %s365, 32
      %v370 = vphi 0.0, %v873
    $region28: #{model_forward.1} parent=1 // loop_header_branch
      %368 = sbr.rel (%p366) target = $region32
    $region29: #{model_forward.1} parent=1 // loop_body
      %s371 = smul.u32 %s365, 128
      %s372 = sld [smem:[#allocation2 + %s371]]
      %v373 = vstv %s372
      %v374 = vmul.f32 %v209, %v373
      %v375 = vmul.f32 %v208, %v373
      %v376 = vmul.f32 %v207, %v373
      %v377 = vmul.f32 %v206, %v373
      %v378 = vmul.f32 %v205, %v373
      %v379 = vmul.f32 %v204, %v373
      %v380 = vmul.f32 %v203, %v373
      %s381 = sadd.s32 %s371, 1
      %s382 = sld [smem:[#allocation2 + %s381]]
      %v383 = vstv %s382
      %v384 = vmul.f32 %v231, %v383
      %v385 = vmul.f32 %v230, %v383
      %v386 = vmul.f32 %v229, %v383
      %v387 = vmul.f32 %v228, %v383
      %v388 = vmul.f32 %v227, %v383
      %v389 = vmul.f32 %v226, %v383
      %v390 = vmul.f32 %v225, %v383
      %v391 = vadd.f32 %v374, %v384
      %v392 = vadd.f32 %v375, %v385
      %v393 = vadd.f32 %v376, %v386
      %v394 = vadd.f32 %v377, %v387
      %v395 = vadd.f32 %v378, %v388
      %v396 = vadd.f32 %v379, %v389
      %v397 = vadd.f32 %v380, %v390
      %s398 = sadd.s32 %s371, 2
      %s399 = sld [smem:[#allocation2 + %s398]]
      %v400 = vstv %s399
      %v401 = vmul.f32 %v253, %v400
      %v402 = vmul.f32 %v252, %v400
      %v403 = vmul.f32 %v251, %v400
      %v404 = vmul.f32 %v250, %v400
      %v405 = vmul.f32 %v249, %v400
      %v406 = vmul.f32 %v248, %v400
      %v407 = vmul.f32 %v247, %v400
      %v408 = vadd.f32 %v391, %v401
      %v409 = vadd.f32 %v392, %v402
      %v410 = vadd.f32 %v393, %v403
      %v411 = vadd.f32 %v394, %v404
      %v412 = vadd.f32 %v395, %v405
      %v413 = vadd.f32 %v396, %v406
      %v414 = vadd.f32 %v397, %v407
      %s415 = sadd.s32 %s371, 3
      %s416 = sld [smem:[#allocation2 + %s415]]
      %v417 = vstv %s416
      %v418 = vmul.f32 %v275, %v417
      %v419 = vmul.f32 %v274, %v417
      %v420 = vmul.f32 %v273, %v417
      %v421 = vmul.f32 %v272, %v417
      %v422 = vmul.f32 %v271, %v417
      %v423 = vmul.f32 %v270, %v417
      %v424 = vmul.f32 %v269, %v417
      %v425 = vadd.f32 %v408, %v418
      %v426 = vadd.f32 %v409, %v419
      %v427 = vadd.f32 %v410, %v420
      %v428 = vadd.f32 %v411, %v421
      %v429 = vadd.f32 %v412, %v422
      %v430 = vadd.f32 %v413, %v423
      %v431 = vadd.f32 %v414, %v424
      %s432 = sadd.s32 %s371, 4
      %s433 = sld [smem:[#allocation2 + %s432]]
      %v434 = vstv %s433
      %v435 = vmul.f32 %v35, %v434
      %v436 = vmul.f32 %v36, %v434
      %v437 = vmul.f32 %v37, %v434
      %v438 = vmul.f32 %v38, %v434
      %v439 = vmul.f32 %v39, %v434
      %v440 = vmul.f32 %v40, %v434
      %v441 = vmul.f32 %v41, %v434
      %v442 = vadd.f32 %v425, %v435
      %v443 = vadd.f32 %v426, %v436
      %v444 = vadd.f32 %v427, %v437
      %v445 = vadd.f32 %v428, %v438
      %v446 = vadd.f32 %v429, %v439
      %v447 = vadd.f32 %v430, %v440
      %v448 = vadd.f32 %v431, %v441
      %s449 = sadd.s32 %s371, 5
      %s450 = sld [smem:[#allocation2 + %s449]]
      %v451 = vstv %s450
      %v452 = vmul.f32 %v296, %v451
      %v453 = vmul.f32 %v295, %v451
      %v454 = vmul.f32 %v294, %v451
      %v455 = vmul.f32 %v293, %v451
      %v456 = vmul.f32 %v292, %v451
      %v457 = vmul.f32 %v291, %v451
      %v458 = vmul.f32 %v297, %v451
      %v459 = vadd.f32 %v442, %v452
      %v460 = vadd.f32 %v443, %v453
      %v461 = vadd.f32 %v444, %v454
      %v462 = vadd.f32 %v445, %v455
      %v463 = vadd.f32 %v446, %v456
      %v464 = vadd.f32 %v447, %v457
      %v465 = vadd.f32 %v448, %v458
      %s466 = sadd.s32 %s371, 6
      %s467 = sld [smem:[#allocation2 + %s466]]
      %v468 = vstv %s467
      %v469 = vmul.f32 %v318, %v468
      %v470 = vmul.f32 %v317, %v468
      %v471 = vmul.f32 %v316, %v468
      %v472 = vmul.f32 %v315, %v468
      %v473 = vmul.f32 %v314, %v468
      %v474 = vmul.f32 %v313, %v468
      %v475 = vmul.f32 %v319, %v468
      %v476 = vadd.f32 %v459, %v469
      %v477 = vadd.f32 %v460, %v470
      %v478 = vadd.f32 %v461, %v471
      %v479 = vadd.f32 %v462, %v472
      %v480 = vadd.f32 %v463, %v473
      %v481 = vadd.f32 %v464, %v474
      %v482 = vadd.f32 %v465, %v475
      %s483 = sadd.s32 %s371, 7
      %s484 = sld [smem:[#allocation2 + %s483]]
      %v485 = vstv %s484
      %v486 = vmul.f32 %v340, %v485
      %v487 = vmul.f32 %v339, %v485
      %v488 = vmul.f32 %v338, %v485
      %v489 = vmul.f32 %v337, %v485
      %v490 = vmul.f32 %v336, %v485
      %v491 = vmul.f32 %v335, %v485
      %v492 = vmul.f32 %v341, %v485
      %v493 = vadd.f32 %v476, %v486
      %v494 = vadd.f32 %v477, %v487
      %v495 = vadd.f32 %v478, %v488
      %v496 = vadd.f32 %v479, %v489
      %v497 = vadd.f32 %v480, %v490
      %v498 = vadd.f32 %v481, %v491
      %v499 = vadd.f32 %v482, %v492
      %s500 = sadd.s32 %s371, 8
      %s501 = sld [smem:[#allocation2 + %s500]]
      %v502 = vstv %s501
      %v503 = vmul.f32 %v362, %v502
      %v504 = vmul.f32 %v361, %v502
      %v505 = vmul.f32 %v360, %v502
      %v506 = vmul.f32 %v359, %v502
      %v507 = vmul.f32 %v358, %v502
      %v508 = vmul.f32 %v357, %v502
      %v509 = vmul.f32 %v363, %v502
      %v510 = vadd.f32 %v493, %v503
      %v511 = vadd.f32 %v494, %v504
      %v512 = vadd.f32 %v495, %v505
      %v513 = vadd.f32 %v496, %v506
      %v514 = vadd.f32 %v497, %v507
      %v515 = vadd.f32 %v498, %v508
      %v516 = vadd.f32 %v499, %v509
      %s517 = sadd.s32 %s371, 9
      %s518 = sld [smem:[#allocation2 + %s517]]
      %v519 = vstv %s518
      %v520 = vadd.f32 %v510, %v519
      %v521 = vadd.f32 %v511, %v519
      %v522 = vadd.f32 %v512, %v519
      %v523 = vadd.f32 %v513, %v519
      %v524 = vadd.f32 %v514, %v519
      %v525 = vadd.f32 %v515, %v519
      %v526 = vadd.f32 %v516, %v519
      %vm527 = vcmp.gt.f32.partialorder %v520, 0.0
      %vm528 = vcmp.gt.f32.partialorder %v521, 0.0
      %vm529 = vcmp.gt.f32.partialorder %v522, 0.0
      %vm530 = vcmp.gt.f32.partialorder %v523, 0.0
      %vm531 = vcmp.gt.f32.partialorder %v524, 0.0
      %vm532 = vcmp.gt.f32.partialorder %v525, 0.0
      %vm533 = vcmp.gt.f32.partialorder %v526, 0.0
      %v534 = vmul.f32 %v520, 1.442695
      %v535 = vpow.pop %v534
      %v536 = vmul.f32 %v521, 1.442695
      %v537 = vpow.pop %v536
      %v538 = vmul.f32 %v522, 1.442695
      %v539 = vpow.pop %v538
      %v540 = vmul.f32 %v523, 1.442695
      %v541 = vpow.pop %v540
      %v542 = vmul.f32 %v524, 1.442695
      %v543 = vpow.pop %v542
      %v544 = vmul.f32 %v525, 1.442695
      %v545 = vpow.pop %v544
      %v546 = vmul.f32 %v526, 1.442695
      %v547 = vpow.pop %v546
      %v548 = vsub.f32 %v535, 1.0
      %v549 = vsub.f32 %v537, 1.0
      %v550 = vsub.f32 %v539, 1.0
      %v551 = vsub.f32 %v541, 1.0
      %v552 = vsub.f32 %v543, 1.0
      %v553 = vsub.f32 %v545, 1.0
      %v554 = vsub.f32 %v547, 1.0
      %v555 = vmul.f32 %v548, 1.6732632
      %v556 = vmul.f32 %v549, 1.6732632
      %v557 = vmul.f32 %v550, 1.6732632
      %v558 = vmul.f32 %v551, 1.6732632
      %v559 = vmul.f32 %v552, 1.6732632
      %v560 = vmul.f32 %v553, 1.6732632
      %v561 = vmul.f32 %v554, 1.6732632
      %v562 = vsel %vm527, %v520, %v555
      %v563 = vsel %vm528, %v521, %v556
      %v564 = vsel %vm529, %v522, %v557
      %v565 = vsel %vm530, %v523, %v558
      %v566 = vsel %vm531, %v524, %v559
      %v567 = vsel %vm532, %v525, %v560
      %v568 = vsel %vm533, %v526, %v561
      %v569 = vmul.f32 %v562, 1.050701
      %v570 = vmul.f32 %v563, 1.050701
      %v571 = vmul.f32 %v564, 1.050701
      %v572 = vmul.f32 %v565, 1.050701
      %v573 = vmul.f32 %v566, 1.050701
      %v574 = vmul.f32 %v567, 1.050701
      %v575 = vmul.f32 %v568, 1.050701
      %s576 = smul.u32 %s365, 14
      %s577 = smul.addr %s576, 8
      %s578 = scalar_lea.vmem %s3, %s577
      %v579 = vld [vmem:[%s578] sm:$0xff]
      %v580 = vld [vmem:[%s578 + $0x8] sm:$0xff]
      %v581 = vld [vmem:[%s578 + $0x10] sm:$0xff]
      %v582 = vld [vmem:[%s578 + $0x18] sm:$0xff]
      %v583 = vld [vmem:[%s578 + $0x20] sm:$0xff]
      %v584 = vld [vmem:[%s578 + $0x28] sm:$0xff]
      %v585 = vld [vmem:[%s578 + $0x30] sm:$0xff]
      %v586 = vld [vmem:[%s578 + $0x38] sm:$0x3]
      %v587 = vld [vmem:[%s578 + $0x40] sm:$0x3]
      %v588 = vld [vmem:[%s578 + $0x48] sm:$0x3]
      %v589 = vld [vmem:[%s578 + $0x50] sm:$0x3]
      %v590 = vld [vmem:[%s578 + $0x58] sm:$0x3]
      %v591 = vld [vmem:[%s578 + $0x60] sm:$0x3]
      %v592 = vld [vmem:[%s578 + $0x68] sm:$0x3]
      %593 = vmatprep.subr.mxu0 0.0
      %594 = vmatpush1.xpose.msra.mxu0 0.0
      %595 = vmatprep.subr.mxu0 0.0
      %596 = vmatpush1.xpose.msra.mxu0 0.0
      %597 = vmatprep.subr.mxu0 0.0
      %598 = vmatpush1.xpose.msra.mxu0 0.0
      %599 = vmatprep.subr.mxu0 0.0
      %600 = vmatpush1.xpose.msra.mxu0 0.0
      %601 = vmatprep.subr.mxu0 0.0
      %602 = vmatpush1.xpose.msra.mxu0 0.0
      %603 = vmatprep.subr.mxu0 0.0
      %604 = vmatpush1.xpose.msra.mxu0 0.0
      %605 = vmatprep.subr.mxu0 0.0
      %606 = vmatpush1.xpose.msra.mxu0 0.0
      %607 = vmatprep.subr.mxu0 0.0
      %608 = vmatpush1.xpose.msra.mxu0 0.0
      %609 = vmatprep.subr.mxu0 0.0
      %610 = vmatpush1.xpose.msra.mxu0 0.0
      %611 = vmatprep.subr.mxu0 0.0
      %612 = vmatpush1.xpose.msra.mxu0 0.0
      %613 = vmatprep.subr.mxu0 0.0
      %614 = vmatpush1.xpose.msra.mxu0 0.0
      %615 = vmatprep.subr.mxu0 0.0
      %616 = vmatpush1.xpose.msra.mxu0 0.0
      %617 = vmatprep.subr.mxu0 0.0
      %618 = vmatpush1.xpose.msra.mxu0 0.0
      %619 = vmatprep.subr.mxu0 0.0
      %620 = vmatpush1.xpose.msra.mxu0 0.0
      %621 = vmatprep.subr.mxu0 %v587
      %622 = vmatpush1.xpose.msra.mxu0 %v586
      %623 = vmatprep.subr.mxu0 %v580
      %624 = vmatpush1.xpose.msra.mxu0 %v579
      %625 = vmatprep.subr.mxu0 0.0
      %626 = vmatpush2.xpose.msra.mxu0 0.0
      %627 = vmatprep.subr.mxu0 0.0
      %628 = vmatpush2.xpose.msra.mxu0 0.0
      %629 = vmatprep.subr.mxu0 0.0
      %630 = vmatpush2.xpose.msra.mxu0 0.0
      %631 = vmatprep.subr.mxu0 0.0
      %632 = vmatpush2.xpose.msra.mxu0 0.0
      %633 = vmatprep.subr.mxu0 0.0
      %634 = vmatpush2.xpose.msra.mxu0 0.0
      %635 = vmatprep.subr.mxu0 0.0
      %636 = vmatpush2.xpose.msra.mxu0 0.0
      %637 = vmatprep.subr.mxu0 0.0
      %638 = vmatpush2.xpose.msra.mxu0 0.0
      %639 = vmatprep.subr.mxu0 0.0
      %640 = vmatpush2.xpose.msra.mxu0 0.0
      %641 = vmatprep.subr.mxu0 0.0
      %642 = vmatpush2.xpose.msra.mxu0 0.0
      %643 = vmatprep.subr.mxu0 0.0
      %644 = vmatpush2.xpose.msra.mxu0 0.0
      %645 = vmatprep.subr.mxu0 0.0
      %646 = vmatpush2.xpose.msra.mxu0 0.0
      %647 = vmatprep.subr.mxu0 0.0
      %648 = vmatpush2.xpose.msra.mxu0 0.0
      %649 = vmatprep.subr.mxu0 0.0
      %650 = vmatpush2.xpose.msra.mxu0 0.0
      %651 = vmatprep.subr.mxu0 0.0
      %652 = vmatpush2.xpose.msra.mxu0 0.0
      %653 = vmatprep.subr.mxu0 0.0
      %654 = vmatpush2.xpose.msra.mxu0 0.0
      %655 = vmatprep.subr.mxu0 0.0
      %656 = vmatpush2.xpose.msra.mxu0 0.0
      %657 = vmatprep.mubr.f32.mxu0 %v570
      %658 = vmatmul.mubr.f32.gmra.mxu0 %v569
      %v659 = vpop.f32.mrf.mxu0
      %v660 = vadd.f32 0.0, %v659
      %v661 = vpop.f32.mrf.mxu0
      %662 = vdwg.mxu0
      %663 = vmatprep.subr.mxu0 0.0
      %664 = vmatpush1.xpose.msra.mxu0 0.0
      %665 = vmatprep.subr.mxu0 0.0
      %666 = vmatpush1.xpose.msra.mxu0 0.0
      %667 = vmatprep.subr.mxu0 0.0
      %668 = vmatpush1.xpose.msra.mxu0 0.0
      %669 = vmatprep.subr.mxu0 0.0
      %670 = vmatpush1.xpose.msra.mxu0 0.0
      %671 = vmatprep.subr.mxu0 0.0
      %672 = vmatpush1.xpose.msra.mxu0 0.0
      %673 = vmatprep.subr.mxu0 0.0
      %674 = vmatpush1.xpose.msra.mxu0 0.0
      %675 = vmatprep.subr.mxu0 0.0
      %676 = vmatpush1.xpose.msra.mxu0 0.0
      %677 = vmatprep.subr.mxu0 0.0
      %678 = vmatpush1.xpose.msra.mxu0 0.0
      %679 = vmatprep.subr.mxu0 0.0
      %680 = vmatpush1.xpose.msra.mxu0 0.0
      %681 = vmatprep.subr.mxu0 0.0
      %682 = vmatpush1.xpose.msra.mxu0 0.0
      %683 = vmatprep.subr.mxu0 0.0
      %684 = vmatpush1.xpose.msra.mxu0 0.0
      %685 = vmatprep.subr.mxu0 0.0
      %686 = vmatpush1.xpose.msra.mxu0 0.0
      %687 = vmatprep.subr.mxu0 0.0
      %688 = vmatpush1.xpose.msra.mxu0 0.0
      %689 = vmatprep.subr.mxu0 0.0
      %690 = vmatpush1.xpose.msra.mxu0 0.0
      %691 = vmatprep.subr.mxu0 %v589
      %692 = vmatpush1.xpose.msra.mxu0 %v588
      %693 = vmatprep.subr.mxu0 %v582
      %694 = vmatpush1.xpose.msra.mxu0 %v581
      %695 = vmatprep.subr.mxu0 0.0
      %696 = vmatpush2.xpose.msra.mxu0 0.0
      %697 = vmatprep.subr.mxu0 0.0
      %698 = vmatpush2.xpose.msra.mxu0 0.0
      %699 = vmatprep.subr.mxu0 0.0
      %700 = vmatpush2.xpose.msra.mxu0 0.0
      %701 = vmatprep.subr.mxu0 0.0
      %702 = vmatpush2.xpose.msra.mxu0 0.0
      %703 = vmatprep.subr.mxu0 0.0
      %704 = vmatpush2.xpose.msra.mxu0 0.0
      %705 = vmatprep.subr.mxu0 0.0
      %706 = vmatpush2.xpose.msra.mxu0 0.0
      %707 = vmatprep.subr.mxu0 0.0
      %708 = vmatpush2.xpose.msra.mxu0 0.0
      %709 = vmatprep.subr.mxu0 0.0
      %710 = vmatpush2.xpose.msra.mxu0 0.0
      %711 = vmatprep.subr.mxu0 0.0
      %712 = vmatpush2.xpose.msra.mxu0 0.0
      %713 = vmatprep.subr.mxu0 0.0
      %714 = vmatpush2.xpose.msra.mxu0 0.0
      %715 = vmatprep.subr.mxu0 0.0
      %716 = vmatpush2.xpose.msra.mxu0 0.0
      %717 = vmatprep.subr.mxu0 0.0
      %718 = vmatpush2.xpose.msra.mxu0 0.0
      %719 = vmatprep.subr.mxu0 0.0
      %720 = vmatpush2.xpose.msra.mxu0 0.0
      %721 = vmatprep.subr.mxu0 0.0
      %722 = vmatpush2.xpose.msra.mxu0 0.0
      %723 = vmatprep.subr.mxu0 0.0
      %724 = vmatpush2.xpose.msra.mxu0 0.0
      %725 = vmatprep.subr.mxu0 0.0
      %726 = vmatpush2.xpose.msra.mxu0 0.0
      %727 = vmatprep.mubr.f32.mxu0 %v572
      %728 = vmatmul.mubr.f32.gmra.mxu0 %v571
      %v729 = vpop.f32.mrf.mxu0
      %v730 = vadd.f32 %v660, %v729
      %v731 = vpop.f32.mrf.mxu0
      %732 = vdwg.mxu0
      %733 = vmatprep.subr.mxu0 0.0
      %734 = vmatpush1.xpose.msra.mxu0 0.0
      %735 = vmatprep.subr.mxu0 0.0
      %736 = vmatpush1.xpose.msra.mxu0 0.0
      %737 = vmatprep.subr.mxu0 0.0
      %738 = vmatpush1.xpose.msra.mxu0 0.0
      %739 = vmatprep.subr.mxu0 0.0
      %740 = vmatpush1.xpose.msra.mxu0 0.0
      %741 = vmatprep.subr.mxu0 0.0
      %742 = vmatpush1.xpose.msra.mxu0 0.0
      %743 = vmatprep.subr.mxu0 0.0
      %744 = vmatpush1.xpose.msra.mxu0 0.0
      %745 = vmatprep.subr.mxu0 0.0
      %746 = vmatpush1.xpose.msra.mxu0 0.0
      %747 = vmatprep.subr.mxu0 0.0
      %748 = vmatpush1.xpose.msra.mxu0 0.0
      %749 = vmatprep.subr.mxu0 0.0
      %750 = vmatpush1.xpose.msra.mxu0 0.0
      %751 = vmatprep.subr.mxu0 0.0
      %752 = vmatpush1.xpose.msra.mxu0 0.0
      %753 = vmatprep.subr.mxu0 0.0
      %754 = vmatpush1.xpose.msra.mxu0 0.0
      %755 = vmatprep.subr.mxu0 0.0
      %756 = vmatpush1.xpose.msra.mxu0 0.0
      %757 = vmatprep.subr.mxu0 0.0
      %758 = vmatpush1.xpose.msra.mxu0 0.0
      %759 = vmatprep.subr.mxu0 0.0
      %760 = vmatpush1.xpose.msra.mxu0 0.0
      %761 = vmatprep.subr.mxu0 %v591
      %762 = vmatpush1.xpose.msra.mxu0 %v590
      %763 = vmatprep.subr.mxu0 %v584
      %764 = vmatpush1.xpose.msra.mxu0 %v583
      %765 = vmatprep.subr.mxu0 0.0
      %766 = vmatpush2.xpose.msra.mxu0 0.0
      %767 = vmatprep.subr.mxu0 0.0
      %768 = vmatpush2.xpose.msra.mxu0 0.0
      %769 = vmatprep.subr.mxu0 0.0
      %770 = vmatpush2.xpose.msra.mxu0 0.0
      %771 = vmatprep.subr.mxu0 0.0
      %772 = vmatpush2.xpose.msra.mxu0 0.0
      %773 = vmatprep.subr.mxu0 0.0
      %774 = vmatpush2.xpose.msra.mxu0 0.0
      %775 = vmatprep.subr.mxu0 0.0
      %776 = vmatpush2.xpose.msra.mxu0 0.0
      %777 = vmatprep.subr.mxu0 0.0
      %778 = vmatpush2.xpose.msra.mxu0 0.0
      %779 = vmatprep.subr.mxu0 0.0
      %780 = vmatpush2.xpose.msra.mxu0 0.0
      %781 = vmatprep.subr.mxu0 0.0
      %782 = vmatpush2.xpose.msra.mxu0 0.0
      %783 = vmatprep.subr.mxu0 0.0
      %784 = vmatpush2.xpose.msra.mxu0 0.0
      %785 = vmatprep.subr.mxu0 0.0
      %786 = vmatpush2.xpose.msra.mxu0 0.0
      %787 = vmatprep.subr.mxu0 0.0
      %788 = vmatpush2.xpose.msra.mxu0 0.0
      %789 = vmatprep.subr.mxu0 0.0
      %790 = vmatpush2.xpose.msra.mxu0 0.0
      %791 = vmatprep.subr.mxu0 0.0
      %792 = vmatpush2.xpose.msra.mxu0 0.0
      %793 = vmatprep.subr.mxu0 0.0
      %794 = vmatpush2.xpose.msra.mxu0 0.0
      %795 = vmatprep.subr.mxu0 0.0
      %796 = vmatpush2.xpose.msra.mxu0 0.0
      %797 = vmatprep.mubr.f32.mxu0 %v574
      %798 = vmatmul.mubr.f32.gmra.mxu0 %v573
      %v799 = vpop.f32.mrf.mxu0
      %v800 = vadd.f32 %v730, %v799
      %v801 = vpop.f32.mrf.mxu0
      %802 = vdwg.mxu0
      %803 = vmatprep.subr.mxu0 0.0
      %804 = vmatpush1.xpose.msra.mxu0 0.0
      %805 = vmatprep.subr.mxu0 0.0
      %806 = vmatpush1.xpose.msra.mxu0 0.0
      %807 = vmatprep.subr.mxu0 0.0
      %808 = vmatpush1.xpose.msra.mxu0 0.0
      %809 = vmatprep.subr.mxu0 0.0
      %810 = vmatpush1.xpose.msra.mxu0 0.0
      %811 = vmatprep.subr.mxu0 0.0
      %812 = vmatpush1.xpose.msra.mxu0 0.0
      %813 = vmatprep.subr.mxu0 0.0
      %814 = vmatpush1.xpose.msra.mxu0 0.0
      %815 = vmatprep.subr.mxu0 0.0
      %816 = vmatpush1.xpose.msra.mxu0 0.0
      %817 = vmatprep.subr.mxu0 0.0
      %818 = vmatpush1.xpose.msra.mxu0 0.0
      %819 = vmatprep.subr.mxu0 0.0
      %820 = vmatpush1.xpose.msra.mxu0 0.0
      %821 = vmatprep.subr.mxu0 0.0
      %822 = vmatpush1.xpose.msra.mxu0 0.0
      %823 = vmatprep.subr.mxu0 0.0
      %824 = vmatpush1.xpose.msra.mxu0 0.0
      %825 = vmatprep.subr.mxu0 0.0
      %826 = vmatpush1.xpose.msra.mxu0 0.0
      %827 = vmatprep.subr.mxu0 0.0
      %828 = vmatpush1.xpose.msra.mxu0 0.0
      %829 = vmatprep.subr.mxu0 0.0
      %830 = vmatpush1.xpose.msra.mxu0 0.0
      %831 = vmatprep.subr.mxu0 0.0
      %832 = vmatpush1.xpose.msra.mxu0 %v592
      %833 = vmatprep.subr.mxu0 0.0
      %834 = vmatpush1.xpose.msra.mxu0 %v585
      %835 = vmatprep.subr.mxu0 0.0
      %836 = vmatpush2.xpose.msra.mxu0 0.0
      %837 = vmatprep.subr.mxu0 0.0
      %838 = vmatpush2.xpose.msra.mxu0 0.0
      %839 = vmatprep.subr.mxu0 0.0
      %840 = vmatpush2.xpose.msra.mxu0 0.0
      %841 = vmatprep.subr.mxu0 0.0
      %842 = vmatpush2.xpose.msra.mxu0 0.0
      %843 = vmatprep.subr.mxu0 0.0
      %844 = vmatpush2.xpose.msra.mxu0 0.0
      %845 = vmatprep.subr.mxu0 0.0
      %846 = vmatpush2.xpose.msra.mxu0 0.0
      %847 = vmatprep.subr.mxu0 0.0
      %848 = vmatpush2.xpose.msra.mxu0 0.0
      %849 = vmatprep.subr.mxu0 0.0
      %850 = vmatpush2.xpose.msra.mxu0 0.0
      %851 = vmatprep.subr.mxu0 0.0
      %852 = vmatpush2.xpose.msra.mxu0 0.0
      %853 = vmatprep.subr.mxu0 0.0
      %854 = vmatpush2.xpose.msra.mxu0 0.0
      %855 = vmatprep.subr.mxu0 0.0
      %856 = vmatpush2.xpose.msra.mxu0 0.0
      %857 = vmatprep.subr.mxu0 0.0
      %858 = vmatpush2.xpose.msra.mxu0 0.0
      %859 = vmatprep.subr.mxu0 0.0
      %860 = vmatpush2.xpose.msra.mxu0 0.0
      %861 = vmatprep.subr.mxu0 0.0
      %862 = vmatpush2.xpose.msra.mxu0 0.0
      %863 = vmatprep.subr.mxu0 0.0
      %864 = vmatpush2.xpose.msra.mxu0 0.0
      %865 = vmatprep.subr.mxu0 0.0
      %866 = vmatpush2.xpose.msra.mxu0 0.0
      %867 = vmatprep.mubr.f32.mxu0 0.0
      %868 = vmatmul.mubr.f32.gmra.mxu0 %v575
      %v869 = vpop.f32.mrf.mxu0
      %v870 = vadd.f32 %v800, %v869
      %v871 = vpop.f32.mrf.mxu0
      %872 = vdwg.mxu0
      %v873 = vadd.f32 %v370, %v870
    $region30: #{model_forward.1} parent=1 // loop_footer
      %s369 = sadd.s32 1, %s365
    $region31: #{model_forward.1} parent=1 // loop_footer_branch
      %364 = sbr.rel target = $region27
    $region32: #{model_forward.1} parent=1 // loop_exit
      _
    %v874 = vld [vmem:[%s4] sm:$0x1]
    %v876 = vlaneseq
    %v877 = vshrl.u32 %v876, 7
    %v878 = vsub.s32 0, %v877
    %v879 = vrot.slane %v874, %v878
    %v881 = vadd.f32 %v370, %v879
    %vm882 = vcmask 80896
    %v883 = vsel %vm882, %v881, -inf
    %884 = vmax.xlane.f32.xlu0 %v883
    %v885 = vpop.xlane.xlu0 %884
    %v886 = vsub.f32 %v881, %v885
    %v887 = vmul.f32 %v886, 1.442695
    %v888 = vpow.pop %v887
    %v889 = vsel %vm882, %v888, 0.0
    %890 = vadd.xlane.f32.xlu0 %v889
    %v891 = vpop.xlane.xlu0 %890
    %v892 = vrcp.pop %v891
    %v893 = vmul.f32 %v888, %v892
    %894 = vst.msk [vmem:[%s5] sm:$0xff] %vm882, %v893
    // Predicated region
    $region33: #{model_forward.1} parent=1 // pred_check
      _
    $region34: #{model_forward.1} parent=1 // pred_check_branch
      %896 = sbr.rel (0) target = $region36
    $region35: #{model_forward.1} parent=1 // pred_region
      _
    $region36: #{model_forward.1} parent=1 // pred_fallthru
      _
    // Predicated region
    $region37: #{model_forward.1} parent=1 // pred_check
      _
    $region38: #{model_forward.1} parent=1 // pred_check_branch
      %898 = sbr.rel (0) target = $region40
    $region39: #{model_forward.1} parent=1 // pred_region
      _
    $region40: #{model_forward.1} parent=1 // pred_fallthru
      _
    %899 = vsyncpa [#allocation3], 1

</llo_original>
